<compile_context>
chip_gen: v6e
topology: v6e:2x2x1
jax: 0.10.0
libtpu: 0.0.40
codegen_flags: <defaults>
</compile_context>

<pallas_src>
import functools

import jax
import jax.numpy as jnp
from jax.experimental import pallas as pl
from jax.experimental.pallas import tpu as pltpu


# ----------------------------------------------------------------------------
# Tiling helper: largest block <= target that divides `dim` and is a multiple
# of `quantum` (or the full dim, which is always legal).
# ----------------------------------------------------------------------------
def _pick_block(dim, target, quantum):
    if dim <= target:
        return dim
    t = (target // quantum) * quantum
    while t >= quantum:
        if dim % t == 0:
            return t
        t -= quantum
    return dim


# ----------------------------------------------------------------------------
# Kernel 1a: per-relation projection XW_r = X @ W_r, written as one stacked
# [R*N, Do] slab (rows of relation r live at r*N : (r+1)*N).  Computed once so
# the row-tiled main matmul never recomputes it.
# ----------------------------------------------------------------------------
def _xw_kernel(x_ref, w_ref, o_ref):
    o_ref[...] = jnp.dot(x_ref[...], w_ref[0], preferred_element_type=jnp.float32)


# ----------------------------------------------------------------------------
# Kernel 1b: fused relation-sum layer:  out = [relu]( A_cat @ XW_cat + b_sum ).
# Grid = (row tiles [parallel], K tiles [arbitrary, reduction last]).
# Accumulates directly into the resident output block (no VMEM scratch).
# ----------------------------------------------------------------------------
def _layer_matmul_kernel(a_ref, xw_ref, b_ref, o_ref, *, apply_relu):
    k = pl.program_id(1)

    @pl.when(k == 0)
    def _():
        o_ref[...] = jnp.zeros_like(o_ref)

    o_ref[...] += jnp.dot(a_ref[...], xw_ref[...], preferred_element_type=jnp.float32)

    @pl.when(k == pl.num_programs(1) - 1)
    def _():
        res = o_ref[...] + b_ref[...]          # summed bias added once (hoisted)
        if apply_relu:
            res = jnp.maximum(res, 0.0)
        o_ref[...] = res


def rgcn_layer(a_cat, x, w, b, *, apply_relu):
    """One HeteroGraphConv('sum') layer: sum_r A_r @ X @ W_r + b_r [+ relu]."""
    R, din, dout = w.shape
    N = x.shape[0]
    K = a_cat.shape[1]                         # == R * N

    # Stage 1: XW_cat [R*N, dout] (one small matmul per relation).
    xw_cat = pl.pallas_call(
        _xw_kernel,
        out_shape=jax.ShapeDtypeStruct((R * N, dout), jnp.float32),
        grid=(R,),
        in_specs=[
            pl.BlockSpec((N, din), lambda r: (0, 0)),          # X resident
            pl.BlockSpec((1, din, dout), lambda r: (r, 0, 0)),
        ],
        out_specs=pl.BlockSpec((N, dout), lambda r: (r, 0)),
        compiler_params=pltpu.CompilerParams(dimension_semantics=("parallel",)),
    )(x, w)

    # Stage 2: single long-K matmul, row-tiled (parallel) x K-tiled (reduction).
    b_sum = jnp.sum(b, axis=0, keepdims=True)                   # [1, dout]
    tm = _pick_block(N, 256, 8)                                  # row tile
    tk = _pick_block(K, 512, 128)                                # contraction tile
    grid = (N // tm, K // tk)

    # TODO(synk): for mem-bound v5e, cast a_cat / xw_cat to bf16 here (keep f32
    # accumulation via preferred_element_type) after validating tolerance.
    return pl.pallas_call(
        functools.partial(_layer_matmul_kernel, apply_relu=apply_relu),
        out_shape=jax.ShapeDtypeStruct((N, dout), jnp.float32),
        grid=grid,
        in_specs=[
            pl.BlockSpec((tm, tk), lambda i, k: (i, k)),
            pl.BlockSpec((tk, dout), lambda i, k: (k, 0)),
            pl.BlockSpec((1, dout), lambda i, k: (0, 0)),
        ],
        out_specs=pl.BlockSpec((tm, dout), lambda i, k: (i, 0)),
        compiler_params=pltpu.CompilerParams(
            dimension_semantics=("parallel", "arbitrary"),
            vmem_limit_bytes=48 * 1024 * 1024,   # ~25% headroom on v7x's 64 MiB
        ),
    )(a_cat, xw_cat, b_sum)


# ----------------------------------------------------------------------------
# Kernel 2: FeatureAttentionLayer (multi-head self-attention over clusters +
# feedforward + residual + mean over clusters) FUSED with the classifier.
# BatchNorm1d (eval, running stats) is folded into the classifier weights in
# the wrapper, so the kernel ends with a single [1,H] @ [H,n_classes] matmul.
# Grid = (batch,) marked "parallel" (shards across TensorCores on v7x).
# ----------------------------------------------------------------------------
def _attn_classify_kernel(x_ref, wq_ref, wk_ref, wv_ref, lw_ref, lb_ref,
                          wc_ref, bc_ref, ge_ref, logit_ref, *, n_heads, cluster):
    C, H = x_ref.shape[1], x_ref.shape[2]
    d = H // n_heads
    scale = 1.0 / (cluster ** 0.5)     # reference scales by 1/sqrt(cluster)

    x = x_ref[0]                                                          # [C, H]
    q = jnp.dot(x, wq_ref[...], preferred_element_type=jnp.float32)
    k = jnp.dot(x, wk_ref[...], preferred_element_type=jnp.float32)
    v = jnp.dot(x, wv_ref[...], preferred_element_type=jnp.float32)

    # TODO(synk): heads kept as a static loop over lane slices; a head-batched
    # einsum needs a lane-splitting reshape that Mosaic may not lower cleanly
    # at these tiny head dims, so the safe form is kept.
    head_outs = []
    for h in range(n_heads):
        qh = q[:, h * d:(h + 1) * d]
        kh = k[:, h * d:(h + 1) * d]
        vh = v[:, h * d:(h + 1) * d]
        s = jnp.dot(qh, kh.T, preferred_element_type=jnp.float32) * scale  # [C, C]
        s = s - jnp.max(s, axis=-1, keepdims=True)
        p = jnp.exp(s)
        p = p * pl.reciprocal(jnp.sum(p, axis=-1, keepdims=True), approx=True)
        head_outs.append(jnp.dot(p, vh, preferred_element_type=jnp.float32))
    attn = jnp.concatenate(head_outs, axis=-1)                            # [C, H]

    ff = jnp.maximum(
        jnp.dot(attn, lw_ref[...], preferred_element_type=jnp.float32) + lb_ref[...],
        0.0) + attn
    out = ff + x                                                          # residual
    ge = jnp.mean(out, axis=0, keepdims=True)                             # [1, H]

    ge_ref[0] = ge
    logit_ref[0] = jnp.dot(ge, wc_ref[...], preferred_element_type=jnp.float32) + bc_ref[...]


def attention_classify(x, wq, wk, wv, lin_w, lin_b, wc_bn, bc_bn, *, n_heads, cluster):
    B, C, H = x.shape
    n_classes = wc_bn.shape[1]
    ge3, lg3 = pl.pallas_call(
        functools.partial(_attn_classify_kernel, n_heads=n_heads, cluster=cluster),
        out_shape=(jax.ShapeDtypeStruct((B, 1, H), jnp.float32),
                   jax.ShapeDtypeStruct((B, 1, n_classes), jnp.float32)),
        grid=(B,),
        in_specs=[
            pl.BlockSpec((1, C, H), lambda b: (b, 0, 0)),
            pl.BlockSpec((H, H), lambda b: (0, 0)),
            pl.BlockSpec((H, H), lambda b: (0, 0)),
            pl.BlockSpec((H, H), lambda b: (0, 0)),
            pl.BlockSpec((H, H), lambda b: (0, 0)),
            pl.BlockSpec((1, H), lambda b: (0, 0)),
            pl.BlockSpec((H, n_classes), lambda b: (0, 0)),
            pl.BlockSpec((1, n_classes), lambda b: (0, 0)),
        ],
        out_specs=(pl.BlockSpec((1, 1, H), lambda b: (b, 0, 0)),
                   pl.BlockSpec((1, 1, n_classes), lambda b: (b, 0, 0))),
        compiler_params=pltpu.CompilerParams(dimension_semantics=("parallel",)),
    )(x, wq, wk, wv, lin_w, lin_b.reshape(1, H), wc_bn, bc_bn.reshape(1, n_classes))
    return ge3[:, 0, :], lg3[:, 0, :]


# ----------------------------------------------------------------------------
# Full forward (glue in plain JAX, hot paths in the kernels above).
# ----------------------------------------------------------------------------
def hetero_classifier_forward(params, a_norm, x, *, batch, node_num,
                              hidden_dim, cluster, n_heads):
    R, N, _ = a_norm.shape
    # Relations concatenated on the contraction axis: A_cat[n, r*N + m] = A_r[n, m].
    a_cat = jnp.transpose(a_norm, (1, 0, 2)).reshape(N, R * N)

    # RGCN: conv1 (sum over relations) -> relu -> conv2 (sum over relations)
    h1 = rgcn_layer(a_cat, x, params["w1"], params["b1"], apply_relu=True)
    h = rgcn_layer(a_cat, h1, params["w2"], params["b2"], apply_relu=False)

    node_embedding = h.reshape(batch, node_num, hidden_dim)

    # TODO(synk): sklearn KMeans feature clustering is data-dependent /
    # non-deterministic; replaced by a static round-robin feature->cluster map.
    # With the round-robin map both the node and feature selections are static
    # strided slices (no gathers).
    # TODO(synk): PyTorch builds a fresh randomly-initialized nn.Linear per
    # forward for the resize; fixed deterministic weights are used instead.
    resized = []
    for key in range(cluster):
        filt = node_embedding[:, key::cluster, key::cluster]              # [B, nk, fk]
        pooled = jnp.mean(filt, axis=1)                                   # [B, fk]
        resized.append(pooled @ params["w_nl"][key] + params["b_nl"][key])  # [B, H]
    node_embedding_input = jnp.stack(resized, axis=1)                     # [B, cluster, H]

    # Fold eval-mode BatchNorm1d into the classifier weights.
    inv = params["bn_gamma"] / jnp.sqrt(params["bn_rvar"] + 1e-5)
    wc_bn = params["wc"] * inv[:, None]
    bc_bn = params["bc"] + (params["bn_beta"] - params["bn_rmean"] * inv) @ params["wc"]

    graph_embedding, label_embedding = attention_classify(
        node_embedding_input, params["wq"], params["wk"], params["wv"],
        params["lin_w"], params["lin_b"], wc_bn, bc_bn,
        n_heads=n_heads, cluster=cluster)                                 # [B,H], [B,C_out]

    # hg_raw = sum over ntypes of dgl.mean_nodes (single ntype 'region')
    hg_raw = jnp.mean(node_embedding, axis=1)                             # [B, H]
    diff = graph_embedding.reshape(-1) - hg_raw.reshape(-1) + 1e-6
    reconstruction_loss = jnp.sqrt(jnp.sum(diff * diff))                  # F.pairwise_distance p=2

    return label_embedding, reconstruction_loss


if __name__ == "__main__":
    # Small shapes consistent with the module.
    batch, node_num = 2, 8
    in_dim, hidden_dim, n_classes = 16, 32, 5
    cluster, n_heads = 4, 4
    rel_names = ("r0", "r1")
    R = len(rel_names)
    N = batch * node_num

    key = jax.random.PRNGKey(0)
    ks = jax.random.split(key, 24)

    def xavier(k, shape):
        fan_in, fan_out = shape[-2], shape[-1]
        limit = (6.0 / (fan_in + fan_out)) ** 0.5
        return jax.random.uniform(k, shape, jnp.float32, -limit, limit)

    # Node features ("region" features, flattened over the batched graph).
    x = jax.random.normal(ks[0], (N, in_dim), dtype=jnp.float32)

    # Synthetic per-relation adjacency with self loops and symmetric norm.
    a_list = []
    for r in range(R):
        adj = (jax.random.uniform(ks[1 + r], (N, N)) < 0.3).astype(jnp.float32)
        adj = jnp.maximum(adj, jnp.eye(N, dtype=jnp.float32))             # add_self_loop
        deg = jnp.sum(adj, axis=1)
        dinv = 1.0 / jnp.sqrt(deg)
        a_list.append(adj * dinv[:, None] * dinv[None, :])                # norm='both'
    a_norm = jnp.stack(a_list, axis=0)                                    # [R, N, N]

    fk = hidden_dim // cluster
    params = {
        "w1": xavier(ks[3], (R, in_dim, hidden_dim)),
        "b1": jnp.zeros((R, hidden_dim), jnp.float32),
        "w2": xavier(ks[4], (R, hidden_dim, hidden_dim)),
        "b2": jnp.zeros((R, hidden_dim), jnp.float32),
        "wq": xavier(ks[5], (hidden_dim, hidden_dim)),
        "wk": xavier(ks[6], (hidden_dim, hidden_dim)),
        "wv": xavier(ks[7], (hidden_dim, hidden_dim)),
        "lin_w": xavier(ks[8], (hidden_dim, hidden_dim)),   # stored as [in, out]
        "lin_b": jnp.zeros((hidden_dim,), jnp.float32),
        "w_nl": [xavier(ks[9 + i], (fk, hidden_dim)) for i in range(cluster)],
        "b_nl": [jnp.zeros((hidden_dim,), jnp.float32) for _ in range(cluster)],
        "bn_gamma": jnp.ones((hidden_dim,), jnp.float32),
        "bn_beta": jnp.zeros((hidden_dim,), jnp.float32),
        "bn_rmean": jnp.zeros((hidden_dim,), jnp.float32),
        "bn_rvar": jnp.ones((hidden_dim,), jnp.float32),
        "wc": xavier(ks[14], (hidden_dim, n_classes)),      # stored as [in, out]
        "bc": jnp.zeros((n_classes,), jnp.float32),
    }

    logits, recon = hetero_classifier_forward(
        params, a_norm, x, batch=batch, node_num=node_num,
        hidden_dim=hidden_dim, cluster=cluster, n_heads=n_heads)
    jax.block_until_ready((logits, recon))
    assert logits.shape == (batch, n_classes)
    assert recon.shape == ()
    print("KERNEL_OK")
</pallas_src>

<mosaic_0001>
module attributes {stable_mosaic.version = 11 : i64} {
  func.func @_xw_kernel(%arg0: i32, %arg1: memref<16x16xf32, #tpu.memory_space<vmem>>, %arg2: memref<1x16x32xf32, #tpu.memory_space<vmem>>, %arg3: memref<16x32xf32, #tpu.memory_space<vmem>>) attributes {dimension_semantics = [#tpu.dimension_semantics<parallel>], iteration_bounds = array<i64: 2>, scalar_prefetch = 0 : i64, scratch_operands = 0 : i64, tpu.core_type = #tpu.core_type<tc>, window_params = [{pipeline_mode = #tpu.pipeline_mode<synchronous>, transform_indices = @transform_0, window_bounds = array<i64: 16, 16>}, {transform_indices = @transform_1, window_bounds = array<i64: 1, 16, 32>}, {transform_indices = @transform_2, window_bounds = array<i64: 16, 32>}]} {
    %c0 = arith.constant 0 : index
    %c0_0 = arith.constant 0 : index
    %0 = vector.load %arg1[%c0, %c0_0] : memref<16x16xf32, #tpu.memory_space<vmem>>, vector<16x16xf32>
    %c0_1 = arith.constant 0 : index
    %c0_2 = arith.constant 0 : index
    %c0_3 = arith.constant 0 : index
    %1 = vector.load %arg2[%c0_1, %c0_2, %c0_3] : memref<1x16x32xf32, #tpu.memory_space<vmem>>, vector<1x16x32xf32>
    %2 = vector.shape_cast %1 : vector<1x16x32xf32> to vector<16x32xf32>
    %cst = arith.constant dense<0.000000e+00> : vector<16x32xf32>
    %3 = tpu.matmul %0, %2, %cst {dimension_numbers = #tpu.dot_dimension_numbers<[1], [0], [0], [1], [0, 0, 1, 1], [], []>} : vector<16x16xf32>, vector<16x32xf32>, vector<16x32xf32> -> vector<16x32xf32>
    %c0_4 = arith.constant 0 : index
    %c0_5 = arith.constant 0 : index
    %4 = vector.load %arg3[%c0_4, %c0_5] : memref<16x32xf32, #tpu.memory_space<vmem>>, vector<16x32xf32>
    tpu.vector_store %arg3[%c0_4, %c0_5], %3 {strides = array<i32>} : memref<16x32xf32, #tpu.memory_space<vmem>>, vector<16x32xf32>,
    return
  }
  func.func @transform_0(%arg0: i32) -> (i32, i32) {
    %c0_i32 = arith.constant 0 : i32
    %c0_i32_0 = arith.constant 0 : i32
    %c0_i32_1 = arith.constant 0 : i32
    return %c0_i32, %c0_i32_0 : i32, i32
  }
  func.func @transform_1(%arg0: i32) -> (i32, i32, i32) {
    %c0_i32 = arith.constant 0 : i32
    %c0_i32_0 = arith.constant 0 : i32
    %c0_i32_1 = arith.constant 0 : i32
    return %arg0, %c0_i32, %c0_i32_0 : i32, i32, i32
  }
  func.func @transform_2(%arg0: i32) -> (i32, i32) {
    %c0_i32 = arith.constant 0 : i32
    %c0_i32_0 = arith.constant 0 : i32
    return %arg0, %c0_i32 : i32, i32
  }
}

</mosaic_0001>

<llo_original>
// kernel: tpu_custom_call.1
$region0: #{tpu_custom_call.1}
  #allocation0 [shape = 'u32[]', space=smem, size = 0x4, offset = 0x4, fixed_abs, tag = 'smem constant byte address 0x4 - core index']
  #allocation1 [shape = 'u32[144,128]{1,0:T(1,128)}', space=vmem, size = 0x12000, scoped, tag = 'internal scratch']
  %s0 = inlined_call_operand.hbm [shape: f32[16,16], index: 0, kind: input, shape index: {}]
  %s1 = inlined_call_operand.hbm [shape: f32[2,16,32], index: 1, kind: input, shape index: {}]
  %s2 = inlined_call_operand.hbm [shape: f32[32,32], index: 2, kind: output, shape index: {}]
  %s3 = sld [smem:[#allocation0]]
  $region49: #{tpu_custom_call.1} parent=0
    _
  %s5 = ssub.s32 1, %s3
  %s6 = scalar_select 0, %s5, %s3
  $region1: #{tpu_custom_call.1} parent=0
    #allocation2 [shape = 'u8[8192]{0}', space=vmem, size = 0x2000, scoped, tag = 'input window, operand 0, single buffered']
    #allocation3 [shape = 's32[2]{0}', space=sflag, size = 0x8, scoped, tag = 'scoped memory for tpu_custom_call.1']
    #allocation4 [shape = 's32[2]{0}', space=sflag, size = 0x8, scoped, tag = 'scoped memory for tpu_custom_call.1']
    #allocation5 [shape = 'u8[16384]{0}', space=vmem, size = 0x4000, scoped, tag = 'input window, operand 1']
    #allocation6 [shape = 's32[2]{0}', space=sflag, size = 0x8, scoped, tag = 'scoped memory for tpu_custom_call.1']
    #allocation7 [shape = 'u8[16384]{0}', space=vmem, size = 0x4000, scoped, tag = 'output window, operand 0']
    %7 = vsyncpa [#allocation3], 0
    %8 = vsyncpa [#allocation6], 0
    %s9 = scalar_lea.sflag [#allocation6], 1
    %10 = vsyncpa %s9, 0
    %11 = vsyncpa [#allocation4], 0
    %s12 = scalar_lea.sflag [#allocation4], 1
    %13 = vsyncpa %s12, 0
    loop: start=0, step=1, limit=4
    $region2: #{tpu_custom_call.1} parent=1 // loop_pre_header
      _
    $region3: #{tpu_custom_call.1} parent=1 // loop_header
      %s15 = sphi 0, %s19
      %p16 = scmp.ge.s32.totalorder %s15, 4
      %s23 = sphi 0, %s23
      %s25 = sphi 0, %s23
      %s26 = sphi 0, %s25
      %s40 = sphi 0, %s26
      %s46 = sphi 0, %s48
      %s49 = sphi 0, %s46
      %s50 = sphi 0, %s49
      %s66 = sphi 0, %s50
      %s72 = sphi 0, %s74
      %s75 = sphi 0, %s72
      %s76 = sphi 0, %s75
      %s92 = sphi 0, %s76
    $region4: #{tpu_custom_call.1} parent=1 // loop_header_branch
      %18 = sbr.rel (%p16) target = $region8
    $region5: #{tpu_custom_call.1} parent=1 // loop_body
      %s20 = ssub.s32 %s15, 1
      %s21 = ssub.s32 %s15, 2
      %s22 = sadd.s32 %s15, 1
      %s24 = sadd.s32 %s23, 1
      %p27 = scmp.eq.s32.totalorder %s15, 1
      %p28 = scmp.ne.s32.totalorder %s23, %s25
      %p29 = scmp.eq.s32.totalorder %s15, 0
      %p30 = por %p28, %p29
      %p31 = scmp.ne.s32.totalorder %s23, %s25
      %p32 = scmp.eq.s32.totalorder %s20, 1
      %p33 = por %p31, %p32
      %p34 = scmp.ne.s32.totalorder %s25, %s26
      %p35 = scmp.eq.s32.totalorder %s20, 0
      %p36 = por %p34, %p35
      %p37 = scmp.ne.s32.totalorder %s25, %s26
      %p38 = scmp.eq.s32.totalorder %s21, 1
      %p39 = por %p37, %p38
      %p41 = scmp.ne.s32.totalorder %s26, %s40
      %p42 = scmp.eq.s32.totalorder %s21, 0
      %p43 = por %p41, %p42
      %s44 = ssub.s32 %s15, %s22
      %p45 = scmp.eq.s32.totalorder %s44, 0
      %s47 = sadd.s32 %s46, 1
      %s48 = scalar_select %p45, %s46, %s47
      %p51 = pneg %p45
      %p52 = scmp.eq.s32.totalorder %s15, 1
      %p53 = por %p51, %p52
      %p54 = scmp.ne.s32.totalorder %s46, %s49
      %p55 = scmp.eq.s32.totalorder %s15, 0
      %p56 = por %p54, %p55
      %p57 = scmp.ne.s32.totalorder %s46, %s49
      %p58 = scmp.eq.s32.totalorder %s20, 1
      %p59 = por %p57, %p58
      %p60 = scmp.ne.s32.totalorder %s49, %s50
      %p61 = scmp.eq.s32.totalorder %s20, 0
      %p62 = por %p60, %p61
      %p63 = scmp.ne.s32.totalorder %s49, %s50
      %p64 = scmp.eq.s32.totalorder %s21, 1
      %p65 = por %p63, %p64
      %p67 = scmp.ne.s32.totalorder %s50, %s66
      %p68 = scmp.eq.s32.totalorder %s21, 0
      %p69 = por %p67, %p68
      %s70 = ssub.s32 %s15, %s22
      %p71 = scmp.eq.s32.totalorder %s70, 0
      %s73 = sadd.s32 %s72, 1
      %s74 = scalar_select %p71, %s72, %s73
      %p77 = pneg %p71
      %p78 = scmp.eq.s32.totalorder %s15, 1
      %p79 = por %p77, %p78
      %p80 = scmp.ne.s32.totalorder %s72, %s75
      %p81 = scmp.eq.s32.totalorder %s15, 0
      %p82 = por %p80, %p81
      %p83 = scmp.ne.s32.totalorder %s72, %s75
      %p84 = scmp.eq.s32.totalorder %s20, 1
      %p85 = por %p83, %p84
      %p86 = scmp.ne.s32.totalorder %s75, %s76
      %p87 = scmp.eq.s32.totalorder %s20, 0
      %p88 = por %p86, %p87
      %p89 = scmp.ne.s32.totalorder %s75, %s76
      %p90 = scmp.eq.s32.totalorder %s21, 1
      %p91 = por %p89, %p90
      %p93 = scmp.ne.s32.totalorder %s76, %s92
      %p94 = scmp.eq.s32.totalorder %s21, 0
      %p95 = por %p93, %p94
      %p96 = scmp.le.s32.totalorder 1, %s15
      %p97 = scmp.lt.s32.totalorder %s15, 3
      %p98 = pnand %p96, %p97
      %p99 = pneg %p98
      // Predicated region
      $region9: #{tpu_custom_call.1} parent=5 // pred_check
        _
      $region10: #{tpu_custom_call.1} parent=5 // pred_check_branch
        %101 = sbr.rel (%p98) target = $region12
      $region11: #{tpu_custom_call.1} parent=5 // pred_region
        %s102 = ssub.s32 %s15, 1
        // Predicated region
        $region13: #{tpu_custom_call.1} parent=11 // pred_check
          %p103 = pneg %p36
        $region14: #{tpu_custom_call.1} parent=11 // pred_check_branch
          %105 = sbr.rel (%p103) target = $region16
        $region15: #{tpu_custom_call.1} parent=11 // pred_region
          %s107 = ssub.s32 256, 256
          %108 = vsyncadd [#allocation3], %s107
          %s109 = sshll.u32 [#allocation2], 4
          %s110 = int_to_ptr.vmem [resolvable:$true] %s109
          %115 = dma.hbm_to_vmem [thread:$0]  %s0, 256, %s110, [#allocation3], 128, 128, 8
        $region16: #{tpu_custom_call.1} parent=11 // pred_fallthru
          _
      $region12: #{tpu_custom_call.1} parent=5 // pred_fallthru
        _
      %p116 = scmp.lt.s32.totalorder %s15, 2
      // Predicated region
      $region17: #{tpu_custom_call.1} parent=5 // pred_check
        %p117 = pneg %p116
      $region18: #{tpu_custom_call.1} parent=5 // pred_check_branch
        %119 = sbr.rel (%p117) target = $region20
      $region19: #{tpu_custom_call.1} parent=5 // pred_region
        // Predicated region
        $region21: #{tpu_custom_call.1} parent=19 // pred_check
          %p120 = pneg %p56
        $region22: #{tpu_custom_call.1} parent=19 // pred_check_branch
          %122 = sbr.rel (%p120) target = $region24
        $region23: #{tpu_custom_call.1} parent=19 // pred_region
          %s123 = sand.u32 %s46, 1
          %s124 = scalar_lea.sflag [#allocation6], %s123
          %s125 = sand.u32 %s46, 1
          %s126 = smul.addr %s125, 16
          %s127 = scalar_lea.vmem [#allocation5], %s126
          %s129 = ssub.s32 256, 256
          %130 = vsyncadd %s124, %s129
          %s131 = smul.addr %s15, 2
          %s132 = smul.addr %s131, 128
          %s133 = scalar_lea.hbm %s1, %s132
          %s134 = sshll.u32 %s127, 4
          %s135 = int_to_ptr.vmem [resolvable:$true] %s134
          %140 = dma.hbm_to_vmem [thread:$0]  %s133, 256, %s135, %s124, 128, 128, 8
        $region24: #{tpu_custom_call.1} parent=19 // pred_fallthru
          _
      $region20: #{tpu_custom_call.1} parent=5 // pred_fallthru
        _
      %p141 = scmp.le.s32.totalorder 1, %s15
      %p142 = scmp.lt.s32.totalorder %s15, 3
      %p143 = pnand %p141, %p142
      %p144 = pneg %p143
      // Predicated region
      $region25: #{tpu_custom_call.1} parent=5 // pred_check
        _
      $region26: #{tpu_custom_call.1} parent=5 // pred_check_branch
        %146 = sbr.rel (%p143) target = $region28
      $region27: #{tpu_custom_call.1} parent=5 // pred_region
        %s147 = ssub.s32 %s15, 1
        // Predicated region
        $region29: #{tpu_custom_call.1} parent=27 // pred_check
          %p148 = pneg %p36
        $region30: #{tpu_custom_call.1} parent=27 // pred_check_branch
          %150 = sbr.rel (%p148) target = $region32
        $region31: #{tpu_custom_call.1} parent=27 // pred_region
          %151 = dma.done [#allocation3], 256
        $region32: #{tpu_custom_call.1} parent=27 // pred_fallthru
          _
        %s152 = sand.u32 %s49, 1
        %s153 = scalar_lea.sflag [#allocation6], %s152
        %s154 = sand.u32 %s49, 1
        %s155 = smul.addr %s154, 16
        %s156 = scalar_lea.vmem [#allocation5], %s155
        // Predicated region
        $region33: #{tpu_custom_call.1} parent=27 // pred_check
          %p157 = pneg %p62
        $region34: #{tpu_custom_call.1} parent=27 // pred_check_branch
          %159 = sbr.rel (%p157) target = $region36
        $region35: #{tpu_custom_call.1} parent=27 // pred_region
          %160 = dma.done %s153, 256
        $region36: #{tpu_custom_call.1} parent=27 // pred_fallthru
          _
        %p161 = pneg %p36
        %p162 = pneg %p33
        %s163 = sand.u32 %s49, 1
        %s164 = scalar_lea.sflag [#allocation6], %s163
        %s165 = sand.u32 %s49, 1
        %s166 = smul.addr %s165, 16
        %s167 = scalar_lea.vmem [#allocation5], %s166
        %p168 = pneg %p62
        %p169 = pneg %p59
        %p170 = pneg %p88
        %p171 = pneg %p85
        %s172 = sand.u32 %s75, 1
        %s173 = scalar_lea.sflag [#allocation4], %s172
        %s174 = sand.u32 %s75, 1
        %s175 = smul.addr %s174, 16
        %s176 = scalar_lea.vmem [#allocation7], %s175
        %s177 = smul.u32 2, %s20
        %v178 = vld [vmem:[#allocation2] sm:$0xff]
        %v179 = vld [vmem:[#allocation2 + $0x8] sm:$0xff]
        %v180 = vld [vmem:[%s156] sm:$0xff]
        %v181 = vld [vmem:[%s156 + $0x8] sm:$0xff]
        %vm182 = vcmask 130048
        %v184 = vsel %vm182, %v178, 0
        %v187 = vsel %vm182, %v179, 0
        %189 = vmatprep.subr.mxu0 0.0
        %190 = vmatpush1.msra.mxu0 0.0
        %191 = vmatprep.subr.mxu0 0.0
        %192 = vmatpush1.msra.mxu0 0.0
        %193 = vmatprep.subr.mxu0 0.0
        %194 = vmatpush1.msra.mxu0 0.0
        %195 = vmatprep.subr.mxu0 0.0
        %196 = vmatpush1.msra.mxu0 0.0
        %197 = vmatprep.subr.mxu0 0.0
        %198 = vmatpush1.msra.mxu0 0.0
        %199 = vmatprep.subr.mxu0 0.0
        %200 = vmatpush1.msra.mxu0 0.0
        %201 = vmatprep.subr.mxu0 0.0
        %202 = vmatpush1.msra.mxu0 0.0
        %203 = vmatprep.subr.mxu0 0.0
        %204 = vmatpush1.msra.mxu0 0.0
        %205 = vmatprep.subr.mxu0 0.0
        %206 = vmatpush1.msra.mxu0 0.0
        %207 = vmatprep.subr.mxu0 0.0
        %208 = vmatpush1.msra.mxu0 0.0
        %209 = vmatprep.subr.mxu0 0.0
        %210 = vmatpush1.msra.mxu0 0.0
        %211 = vmatprep.subr.mxu0 0.0
        %212 = vmatpush1.msra.mxu0 0.0
        %213 = vmatprep.subr.mxu0 0.0
        %214 = vmatpush1.msra.mxu0 0.0
        %215 = vmatprep.subr.mxu0 0.0
        %216 = vmatpush1.msra.mxu0 0.0
        %217 = vmatprep.subr.mxu0 0.0
        %218 = vmatpush1.msra.mxu0 %v181
        %219 = vmatprep.subr.mxu0 0.0
        %220 = vmatpush1.msra.mxu0 %v180
        %221 = vmatprep.subr.mxu0 0.0
        %222 = vmatpush2.msra.mxu0 0.0
        %223 = vmatprep.subr.mxu0 0.0
        %224 = vmatpush2.msra.mxu0 0.0
        %225 = vmatprep.subr.mxu0 0.0
        %226 = vmatpush2.msra.mxu0 0.0
        %227 = vmatprep.subr.mxu0 0.0
        %228 = vmatpush2.msra.mxu0 0.0
        %229 = vmatprep.subr.mxu0 0.0
        %230 = vmatpush2.msra.mxu0 0.0
        %231 = vmatprep.subr.mxu0 0.0
        %232 = vmatpush2.msra.mxu0 0.0
        %233 = vmatprep.subr.mxu0 0.0
        %234 = vmatpush2.msra.mxu0 0.0
        %235 = vmatprep.subr.mxu0 0.0
        %236 = vmatpush2.msra.mxu0 0.0
        %237 = vmatprep.subr.mxu0 0.0
        %238 = vmatpush2.msra.mxu0 0.0
        %239 = vmatprep.subr.mxu0 0.0
        %240 = vmatpush2.msra.mxu0 0.0
        %241 = vmatprep.subr.mxu0 0.0
        %242 = vmatpush2.msra.mxu0 0.0
        %243 = vmatprep.subr.mxu0 0.0
        %244 = vmatpush2.msra.mxu0 0.0
        %245 = vmatprep.subr.mxu0 0.0
        %246 = vmatpush2.msra.mxu0 0.0
        %247 = vmatprep.subr.mxu0 0.0
        %248 = vmatpush2.msra.mxu0 0.0
        %249 = vmatprep.subr.mxu0 0.0
        %250 = vmatpush2.msra.mxu0 0.0
        %251 = vmatprep.subr.mxu0 0.0
        %252 = vmatpush2.msra.mxu0 0.0
        %253 = vmatprep.mubr.f32.mxu0 0.0
        %254 = vmatmul.mubr.f32.gmra.mxu0 %v184
        %v255 = vpop.f32.mrf.mxu0
        %v256 = vadd.f32 0.0, %v255
        %v257 = vpop.f32.mrf.mxu0
        %258 = vmatprep.mubr.f32.mxu0 0.0
        %259 = vmatmul.mubr.f32.gmra.mxu0 %v187
        %v260 = vpop.f32.mrf.mxu0
        %v261 = vadd.f32 0.0, %v260
        %v262 = vpop.f32.mrf.mxu0
        %263 = vdwg.mxu0
        %vm264 = vcmask 261120
        %265 = vst.msk [vmem:[%s176] sm:$0xff] %vm264, %v256
        %266 = vst.msk [vmem:[%s176 + $0x8] sm:$0xff] %vm264, %v261
        %s267 = sand.u32 %s75, 1
        %s268 = scalar_lea.sflag [#allocation4], %s267
        %s269 = sand.u32 %s75, 1
        %s270 = smul.addr %s269, 16
        %s271 = scalar_lea.vmem [#allocation7], %s270
        // Predicated region
        $region37: #{tpu_custom_call.1} parent=27 // pred_check
          %p272 = pneg %p85
        $region38: #{tpu_custom_call.1} parent=27 // pred_check_branch
          %274 = sbr.rel (%p272) target = $region40
        $region39: #{tpu_custom_call.1} parent=27 // pred_region
          %s275 = smul.u32 2, %s20
          %s277 = ssub.s32 256, 256
          %278 = vsyncadd %s268, %s277
          %s279 = smul.addr %s275, 128
          %s280 = scalar_lea.hbm %s2, %s279
          %s281 = sshll.u32 %s271, 4
          %s282 = int_to_ptr.vmem [resolvable:$true] %s281
          %287 = dma.vmem_to_hbm [thread:$0]  %s282, 256, %s280, %s268, 128, 128, 8
        $region40: #{tpu_custom_call.1} parent=27 // pred_fallthru
          _
      $region28: #{tpu_custom_call.1} parent=5 // pred_fallthru
        _
      %p288 = scmp.le.s32.totalorder 2, %s15
      // Predicated region
      $region41: #{tpu_custom_call.1} parent=5 // pred_check
        %p289 = pneg %p288
      $region42: #{tpu_custom_call.1} parent=5 // pred_check_branch
        %291 = sbr.rel (%p289) target = $region44
      $region43: #{tpu_custom_call.1} parent=5 // pred_region
        %s292 = ssub.s32 %s15, 2
        // Predicated region
        $region45: #{tpu_custom_call.1} parent=43 // pred_check
          %p293 = pneg %p91
        $region46: #{tpu_custom_call.1} parent=43 // pred_check_branch
          %295 = sbr.rel (%p293) target = $region48
        $region47: #{tpu_custom_call.1} parent=43 // pred_region
          %s296 = sand.u32 %s76, 1
          %s297 = scalar_lea.sflag [#allocation4], %s296
          %s298 = sand.u32 %s76, 1
          %s299 = smul.addr %s298, 16
          %s300 = scalar_lea.vmem [#allocation7], %s299
          %301 = dma.done %s297, 256
        $region48: #{tpu_custom_call.1} parent=43 // pred_fallthru
          _
      $region44: #{tpu_custom_call.1} parent=5 // pred_fallthru
        _
    $region6: #{tpu_custom_call.1} parent=1 // loop_footer
      %s19 = sadd.s32 1, %s15
    $region7: #{tpu_custom_call.1} parent=1 // loop_footer_branch
      %14 = sbr.rel target = $region3
    $region8: #{tpu_custom_call.1} parent=1 // loop_exit
      _
    %302 = vsyncpa [#allocation3], 1
    %s303 = scalar_lea.sflag [#allocation3], 1
    %304 = vsyncpa %s303, 1
    %305 = vsyncpa [#allocation6], 1
    %s306 = scalar_lea.sflag [#allocation6], 1
    %307 = vsyncpa %s306, 1
    %308 = vsyncpa [#allocation4], 1
    %s309 = scalar_lea.sflag [#allocation4], 1
    %310 = vsyncpa %s309, 1

</llo_original>
